<compile_context>
chip_gen: v7x
topology: tpu7x:2x2x1
jax: 0.10.0
libtpu: 0.0.40
codegen_flags: <defaults>
</compile_context>

<pallas_src>
import functools

import jax
import jax.numpy as jnp
from jax.experimental import pallas as pl
from jax.experimental.pallas import tpu as pltpu


def _cdiv(a, b):
    return (a + b - 1) // b


def _strategy_kernel(x_ref, w_ref, b_ref, *out_refs,
                     num_t, num_p, s_valid, approx, need_d):
    """One S-tile.

    x_ref : (T*P, tile)  samples, timestep-major rows (row = t*P + p), lane-dense S
    w/b   : (T*P, 1)     per-product affine params, tiled over t
    outs  : [d_ref (T*P, tile) bf16,]  obj_ref (1, 1, P) f32,  dsum_ref (1, T, P) f32
    """
    if need_d:
        d_ref, obj_ref, dsum_ref = out_refs
    else:
        obj_ref, dsum_ref = out_refs

    P, T = num_p, num_t
    tile = x_ref.shape[1]

    # Lane-validity mask for the ragged last tile (OOB lanes of the block hold garbage).
    rem = s_valid - pl.program_id(0) * tile
    lane = jax.lax.broadcasted_iota(jnp.int32, (P, tile), 1)
    mask = lane < rem

    running = jnp.ones((P, tile), jnp.float32)   # exclusive cumprod of (1 - F_j)
    val = jnp.zeros((P, tile), jnp.float32)      # per-sample payoff sum_t d_t * x_t

    # T is small & static -> unrolled.  Per-timestep streaming keeps only (P, tile)
    # temporaries live (no whole-tile f32 copy of x or F).
    for t in range(T):
        r0 = t * P
        x_t = x_ref[r0:r0 + P, :].astype(jnp.float32)
        x_t = jnp.where(mask, x_t, 0.0)          # zero garbage lanes (== zero-pad semantics)
        if t < T - 1:
            z = x_t * w_ref[r0:r0 + P, :] + b_ref[r0:r0 + P, :]
            if approx:
                # exp + approx reciprocal both ride the EUP slot (keeps VALU free; v5e micro-opt)
                f_t = pl.reciprocal(1.0 + jnp.exp(-z), approx=True)
            else:
                f_t = jax.nn.sigmoid(z)
            d_t = f_t * running                  # eq. (8): d_t = F_t * prod_{j<t}(1 - F_j)
            running = running - d_t              # == running * (1 - F_t)
        else:
            d_t = running                        # terminal F_{T-1} forced to 1
        if need_d:
            d_ref[r0:r0 + P, :] = d_t.astype(d_ref.dtype)
        val = val + d_t * x_t
        # per-tile sum over valid samples of d_t  -> drives the (P, T) mean indicator
        dsum_ref[0, t, :] = jnp.sum(jnp.where(mask, d_t, 0.0), axis=1)

    obj_ref[0, 0, :] = jnp.sum(val, axis=1)      # per-tile payoff sum per product


class Strategy:
    """JAX/Pallas realization of the abstract PyTorch Strategy base class."""

    def __init__(self, num_product, prediction_length):
        self.num_product = P = num_product
        self.prediction_length = prediction_length
        self.num_time = T = prediction_length + 1
        # Deterministic parameter init for the per-product affine "neural_net" (eq. 9).
        p = jnp.arange(P, dtype=jnp.float32)
        self.weight = 0.5 + 0.1 * p                          # (P,)
        self.bias = -0.25 + 0.05 * p                         # (P,)
        # Timestep-major copies for the kernel's collapsed (T*P, S) layout: row = t*P + p.
        self.weight_tp = jnp.tile(self.weight, T).reshape(T * P, 1)
        self.bias_tp = jnp.tile(self.bias, T).reshape(T * P, 1)

    # ---------------------------------------------------------------- kernel driver
    def _run(self, samples, tile_s, need_d, approx_sigmoid, samples_layout, d_dtype):
        if samples_layout == "spt":                          # module-spec layout (S, P, T)
            S, P, T = samples.shape
            # The one remaining wrapper HBM pass: S must sit on the lane axis.
            # TODO(synk): callers that can produce (T, P, S) directly should pass
            # samples_layout="tps" to skip this transpose entirely.
            x = jnp.transpose(samples, (2, 1, 0)).reshape(T * P, S)
        else:                                                # kernel-native (T, P, S)
            T, P, S = samples.shape
            x = samples.reshape(T * P, S)
        assert P == self.num_product and T == self.num_time
        TP = T * P

        # Tile selection: largest lane tile <= tile_s that is a multiple of 128 and <= S
        # (ragged tail handled in-kernel).  16384 default fits all generations with the
        # 32 MiB scoped-VMEM request below (v5e would need it; v6e/v7x default is 32 MiB).
        tile_s = max(128, (int(tile_s) // 128) * 128)
        if S < 128:                                          # tiny inputs only: pad to one lane tile
            x = jnp.pad(x, ((0, 0), (0, 128 - S)))
            s_k = 128
        else:
            s_k = S
        tile = min(tile_s, max(128, (s_k // 128) * 128))
        n_tiles = _cdiv(s_k, tile)

        kernel = functools.partial(
            _strategy_kernel, num_t=T, num_p=P, s_valid=S,
            approx=approx_sigmoid, need_d=need_d)

        out_shape, out_specs = [], []
        if need_d:
            out_shape.append(jax.ShapeDtypeStruct((TP, s_k), d_dtype))
            out_specs.append(pl.BlockSpec((TP, tile), lambda i: (0, i)))
        out_shape.append(jax.ShapeDtypeStruct((n_tiles, 1, P), jnp.float32))   # obj partials
        out_specs.append(pl.BlockSpec((1, 1, P), lambda i: (i, 0, 0)))
        out_shape.append(jax.ShapeDtypeStruct((n_tiles, T, P), jnp.float32))   # d-sum partials
        out_specs.append(pl.BlockSpec((1, T, P), lambda i: (i, 0, 0)))

        outs = pl.pallas_call(
            kernel,
            grid=(n_tiles,),
            in_specs=[
                pl.BlockSpec((TP, tile), lambda i: (0, i)),
                pl.BlockSpec((TP, 1), lambda i: (0, 0)),
                pl.BlockSpec((TP, 1), lambda i: (0, 0)),
            ],
            out_specs=tuple(out_specs),
            out_shape=tuple(out_shape),
            compiler_params=pltpu.CompilerParams(
                dimension_semantics=("parallel",),           # S-tiles independent -> 2-TC on v7x
                vmem_limit_bytes=32 * 1024 * 1024,
            ),
        )(x, self.weight_tp, self.bias_tp)

        if need_d:
            d_tp, obj_part, dsum_part = outs
        else:
            d_tp, (obj_part, dsum_part) = None, outs

        inv_s = 1.0 / jnp.float32(S)
        obj = jnp.sum(obj_part, axis=(0, 1)) * inv_s                       # (P,)
        d_mean = jnp.transpose(jnp.sum(dsum_part, axis=0)) * inv_s         # (P, T)
        return d_tp, obj, d_mean, (S, P, T)

    # ---------------------------------------------------------------- public API
    def forward(self, samples, tile_s=16384, need_d=True, approx_sigmoid=False,
                samples_layout="spt", d_layout="spt", d_dtype=jnp.bfloat16):
        # TODO(synk): base-class forward() is `pass`; this is the canonical
        # deep-optimal-stopping realization implied by the docstrings.
        d_tp, obj, _d_mean, (S, P, T) = self._run(
            samples, tile_s, need_d, approx_sigmoid, samples_layout, d_dtype)
        if not need_d:
            return None, obj
        if d_tp.shape[1] != S:                    # only for the tiny padded-S case
            d_tp = d_tp[:, :S]
        d_tps = d_tp.reshape(T, P, S)
        if d_layout == "tps":
            return d_tps, obj                     # kernel-native layout: zero extra HBM passes
        return jnp.transpose(d_tps, (2, 1, 0)), obj   # (S, P, T) per the module docstring

    def objective_function(self, samples, **kwargs):
        # need_d=False path: d is never materialized or written to HBM at all.
        kwargs.setdefault("need_d", False)
        _, obj = self.forward(samples, **kwargs)
        return obj

    def optimal_times(self, approx_d=None, samples=None, **kwargs):
        if approx_d is None:
            # In-kernel (P, T) mean indicator: no full-d materialization or readback.
            _, _, d_mean, _ = self._run(samples, kwargs.get("tile_s", 16384), False,
                                        kwargs.get("approx_sigmoid", False),
                                        kwargs.get("samples_layout", "spt"), jnp.bfloat16)
        elif approx_d.ndim == 3:                  # (S, P, T) per the docstring
            d_mean = jnp.mean(approx_d.astype(jnp.float32), axis=0)
        else:                                     # already a (P, T) mean
            d_mean = approx_d
        return [int(t) for t in jnp.argmax(d_mean, axis=-1)]

    # TODO(synk): load()/save() use torch.load / torch.save checkpoints -> no Pallas equivalent.


def _reference(samples, w, b):
    """Pure-JAX reference for correctness checking."""
    samples = samples.astype(jnp.float32)
    P = samples.shape[1]
    f = jax.nn.sigmoid(samples * w.reshape(1, P, 1) + b.reshape(1, P, 1))
    f = f.at[..., -1].set(1.0)
    one_minus = 1.0 - f
    excl = jnp.concatenate(
        [jnp.ones_like(one_minus[..., :1]),
         jnp.cumprod(one_minus, axis=-1)[..., :-1]], axis=-1)
    d = f * excl
    obj = jnp.mean(jnp.sum(d * samples, axis=-1), axis=0)
    return d, obj


if __name__ == "__main__":
    num_product, prediction_length = 4, 8
    T = prediction_length + 1
    strat = Strategy(num_product, prediction_length)

    # Case 1: ragged S with a small forced tile -> multi-tile grid + in-kernel lane mask.
    S1 = 300
    s1 = jax.random.normal(jax.random.PRNGKey(0), (S1, num_product, T), jnp.float32)
    d1, obj1 = strat.forward(s1, tile_s=256)
    jax.block_until_ready((d1, obj1))
    d1_ref, obj1_ref = _reference(s1, strat.weight, strat.bias)
    assert d1.shape == (S1, num_product, T)
    assert jnp.allclose(obj1, obj1_ref, atol=1e-3, rtol=1e-3), "objective mismatch (case 1)"
    assert jnp.allclose(d1.astype(jnp.float32), d1_ref, atol=5e-3, rtol=5e-3), "d mismatch (case 1)"

    # Zero-copy kernel-native d layout matches the (S, P, T) result.
    d1_tps, _ = strat.forward(s1, tile_s=256, d_layout="tps")
    assert jnp.allclose(jnp.transpose(d1_tps, (2, 1, 0)).astype(jnp.float32),
                        d1.astype(jnp.float32), atol=1e-6), "tps layout mismatch"

    # Case 2: larger Monte-Carlo S with the default big tile (16384) -> 2 tiles, ragged tail.
    S2 = 20000
    s2 = jax.random.normal(jax.random.PRNGKey(1), (S2, num_product, T), jnp.float32)
    d2, obj2 = strat.forward(s2)
    jax.block_until_ready((d2, obj2))
    d2_ref, obj2_ref = _reference(s2, strat.weight, strat.bias)
    assert jnp.allclose(obj2, obj2_ref, atol=1e-3, rtol=1e-3), "objective mismatch (case 2)"
    assert jnp.allclose(d2.astype(jnp.float32), d2_ref, atol=5e-3, rtol=5e-3), "d mismatch (case 2)"

    # Objective-only path: no d materialization / HBM writes at all.
    obj2b = jax.block_until_ready(strat.objective_function(s2))
    assert jnp.allclose(obj2b, obj2_ref, atol=1e-3, rtol=1e-3), "objective-only mismatch"

    # optimal_times via the in-kernel (P, T) mean vs. via the full d tensor.
    t_fast = strat.optimal_times(samples=s2)
    t_full = strat.optimal_times(approx_d=d2)
    assert t_fast == t_full, "optimal_times mismatch"

    # EUP-approx sigmoid smoke test (v5e micro-opt); looser tolerance for the approx recip.
    _, obj1a = strat.forward(s1, tile_s=256, need_d=False, approx_sigmoid=True)
    jax.block_until_ready(obj1a)
    assert jnp.allclose(obj1a, obj1_ref, atol=5e-2, rtol=5e-2), "approx-sigmoid objective mismatch"

    print("KERNEL_OK")
</pallas_src>

<mosaic_0001>
module attributes {stable_mosaic.version = 11 : i64} {
  func.func @_strategy_kernel(%arg0: i32, %arg1: memref<36x256xf32, #tpu.memory_space<vmem>>, %arg2: memref<36x1xf32, #tpu.memory_space<vmem>>, %arg3: memref<36x1xf32, #tpu.memory_space<vmem>>, %arg4: memref<36x256xbf16, #tpu.memory_space<vmem>>, %arg5: memref<1x1x4xf32, #tpu.memory_space<vmem>>, %arg6: memref<1x9x4xf32, #tpu.memory_space<vmem>>) attributes {dimension_semantics = [#tpu.dimension_semantics<parallel>], iteration_bounds = array<i64: 2>, scalar_prefetch = 0 : i64, scratch_operands = 0 : i64, tpu.core_type = #tpu.core_type<tc>, window_params = [{transform_indices = @transform_0, window_bounds = array<i64: 36, 256>}, {pipeline_mode = #tpu.pipeline_mode<synchronous>, transform_indices = @transform_1, window_bounds = array<i64: 36, 1>}, {pipeline_mode = #tpu.pipeline_mode<synchronous>, transform_indices = @transform_2, window_bounds = array<i64: 36, 1>}, {transform_indices = @transform_3, window_bounds = array<i64: 36, 256>}, {transform_indices = @transform_4, window_bounds = array<i64: 1, 1, 4>}, {transform_indices = @transform_5, window_bounds = array<i64: 1, 9, 4>}]} {
    %c256_i32 = arith.constant 256 : i32
    %0 = arith.muli %arg0, %c256_i32 : i32
    %c300_i32 = arith.constant 300 : i32
    %1 = arith.subi %c300_i32, %0 : i32
    %2 = tpu.iota {dimensions = array<i32: 1>} : vector<4x256xi32>
    %3 = vector.broadcast %1 : i32 to vector<4x256xi32>
    %4 = arith.cmpi slt, %2, %3 : vector<4x256xi32>
    %cst = arith.constant 1.000000e+00 : f32
    %5 = vector.broadcast %cst : f32 to vector<4x256xf32>
    %cst_0 = arith.constant 0.000000e+00 : f32
    %6 = vector.broadcast %cst_0 : f32 to vector<4x256xf32>
    %c0 = arith.constant 0 : index
    %c0_1 = arith.constant 0 : index
    %7 = vector.load %arg1[%c0, %c0_1] : memref<36x256xf32, #tpu.memory_space<vmem>>, vector<4x256xf32>
    %cst_2 = arith.constant 0.000000e+00 : f32
    %8 = vector.broadcast %cst_2 : f32 to vector<4x256xf32>
    %9 = arith.select %4, %7, %8 : vector<4x256xi1>, vector<4x256xf32>
    %c0_3 = arith.constant 0 : index
    %c0_4 = arith.constant 0 : index
    %10 = vector.load %arg2[%c0_3, %c0_4] : memref<36x1xf32, #tpu.memory_space<vmem>>, vector<4x1xf32>
    %11 = vector.broadcast %10 : vector<4x1xf32> to vector<4x256xf32>
    %12 = arith.mulf %9, %11 : vector<4x256xf32>
    %c0_5 = arith.constant 0 : index
    %c0_6 = arith.constant 0 : index
    %13 = vector.load %arg3[%c0_5, %c0_6] : memref<36x1xf32, #tpu.memory_space<vmem>>, vector<4x1xf32>
    %14 = vector.broadcast %13 : vector<4x1xf32> to vector<4x256xf32>
    %15 = arith.addf %12, %14 : vector<4x256xf32>
    %16 = arith.negf %15 : vector<4x256xf32>
    %17 = math.exp %16 : vector<4x256xf32>
    %cst_7 = arith.constant 1.000000e+00 : f32
    %18 = vector.broadcast %cst_7 : f32 to vector<4x256xf32>
    %19 = arith.addf %18, %17 : vector<4x256xf32>
    %20 = arith.divf %18, %19 : vector<4x256xf32>
    %21 = arith.mulf %20, %5 : vector<4x256xf32>
    %22 = arith.subf %5, %21 : vector<4x256xf32>
    %23 = arith.truncf %21 : vector<4x256xf32> to vector<4x256xbf16>
    %c0_8 = arith.constant 0 : index
    %c0_9 = arith.constant 0 : index
    %24 = vector.load %arg4[%c0_8, %c0_9] : memref<36x256xbf16, #tpu.memory_space<vmem>>, vector<4x256xbf16>
    tpu.vector_store %arg4[%c0_8, %c0_9], %23 {strides = array<i32>} : memref<36x256xbf16, #tpu.memory_space<vmem>>, vector<4x256xbf16>,
    %25 = arith.mulf %21, %9 : vector<4x256xf32>
    %26 = arith.addf %6, %25 : vector<4x256xf32>
    %cst_10 = arith.constant 0.000000e+00 : f32
    %27 = vector.broadcast %cst_10 : f32 to vector<4x256xf32>
    %28 = arith.select %4, %21, %27 : vector<4x256xi1>, vector<4x256xf32>
    %cst_11 = arith.constant dense<0.000000e+00> : vector<4xf32>
    %29 = vector.multi_reduction <add>, %28, %cst_11 [1] : vector<4x256xf32> to vector<4xf32>
    %c0_12 = arith.constant 0 : index
    %c0_13 = arith.constant 0 : index
    %c0_14 = arith.constant 0 : index
    %30 = vector.load %arg6[%c0_12, %c0_13, %c0_14] : memref<1x9x4xf32, #tpu.memory_space<vmem>>, vector<1x1x4xf32>
    %31 = vector.shape_cast %30 : vector<1x1x4xf32> to vector<4xf32>
    %32 = vector.shape_cast %29 : vector<4xf32> to vector<1x1x4xf32>
    tpu.vector_store %arg6[%c0_12, %c0_13, %c0_14], %32 {strides = array<i32>} : memref<1x9x4xf32, #tpu.memory_space<vmem>>, vector<1x1x4xf32>,
    %c4 = arith.constant 4 : index
    %c0_15 = arith.constant 0 : index
    %33 = vector.load %arg1[%c4, %c0_15] : memref<36x256xf32, #tpu.memory_space<vmem>>, vector<4x256xf32>
    %cst_16 = arith.constant 0.000000e+00 : f32
    %34 = vector.broadcast %cst_16 : f32 to vector<4x256xf32>
    %35 = arith.select %4, %33, %34 : vector<4x256xi1>, vector<4x256xf32>
    %c4_17 = arith.constant 4 : index
    %c0_18 = arith.constant 0 : index
    %36 = vector.load %arg2[%c4_17, %c0_18] : memref<36x1xf32, #tpu.memory_space<vmem>>, vector<4x1xf32>
    %37 = vector.broadcast %36 : vector<4x1xf32> to vector<4x256xf32>
    %38 = arith.mulf %35, %37 : vector<4x256xf32>
    %c4_19 = arith.constant 4 : index
    %c0_20 = arith.constant 0 : index
    %39 = vector.load %arg3[%c4_19, %c0_20] : memref<36x1xf32, #tpu.memory_space<vmem>>, vector<4x1xf32>
    %40 = vector.broadcast %39 : vector<4x1xf32> to vector<4x256xf32>
    %41 = arith.addf %38, %40 : vector<4x256xf32>
    %42 = arith.negf %41 : vector<4x256xf32>
    %43 = math.exp %42 : vector<4x256xf32>
    %cst_21 = arith.constant 1.000000e+00 : f32
    %44 = vector.broadcast %cst_21 : f32 to vector<4x256xf32>
    %45 = arith.addf %44, %43 : vector<4x256xf32>
    %46 = arith.divf %44, %45 : vector<4x256xf32>
    %47 = arith.mulf %46, %22 : vector<4x256xf32>
    %48 = arith.subf %22, %47 : vector<4x256xf32>
    %49 = arith.truncf %47 : vector<4x256xf32> to vector<4x256xbf16>
    %c4_22 = arith.constant 4 : index
    %c0_23 = arith.constant 0 : index
    %50 = vector.load %arg4[%c4_22, %c0_23] : memref<36x256xbf16, #tpu.memory_space<vmem>>, vector<4x256xbf16>
    tpu.vector_store %arg4[%c4_22, %c0_23], %49 {strides = array<i32>} : memref<36x256xbf16, #tpu.memory_space<vmem>>, vector<4x256xbf16>,
    %51 = arith.mulf %47, %35 : vector<4x256xf32>
    %52 = arith.addf %26, %51 : vector<4x256xf32>
    %cst_24 = arith.constant 0.000000e+00 : f32
    %53 = vector.broadcast %cst_24 : f32 to vector<4x256xf32>
    %54 = arith.select %4, %47, %53 : vector<4x256xi1>, vector<4x256xf32>
    %cst_25 = arith.constant dense<0.000000e+00> : vector<4xf32>
    %55 = vector.multi_reduction <add>, %54, %cst_25 [1] : vector<4x256xf32> to vector<4xf32>
    %c0_26 = arith.constant 0 : index
    %c1 = arith.constant 1 : index
    %c0_27 = arith.constant 0 : index
    %56 = vector.load %arg6[%c0_26, %c1, %c0_27] : memref<1x9x4xf32, #tpu.memory_space<vmem>>, vector<1x1x4xf32>
    %57 = vector.shape_cast %56 : vector<1x1x4xf32> to vector<4xf32>
    %58 = vector.shape_cast %55 : vector<4xf32> to vector<1x1x4xf32>
    tpu.vector_store %arg6[%c0_26, %c1, %c0_27], %58 {strides = array<i32>} : memref<1x9x4xf32, #tpu.memory_space<vmem>>, vector<1x1x4xf32>,
    %c8 = arith.constant 8 : index
    %c0_28 = arith.constant 0 : index
    %59 = vector.load %arg1[%c8, %c0_28] : memref<36x256xf32, #tpu.memory_space<vmem>>, vector<4x256xf32>
    %cst_29 = arith.constant 0.000000e+00 : f32
    %60 = vector.broadcast %cst_29 : f32 to vector<4x256xf32>
    %61 = arith.select %4, %59, %60 : vector<4x256xi1>, vector<4x256xf32>
    %c8_30 = arith.constant 8 : index
    %c0_31 = arith.constant 0 : index
    %62 = vector.load %arg2[%c8_30, %c0_31] : memref<36x1xf32, #tpu.memory_space<vmem>>, vector<4x1xf32>
    %63 = vector.broadcast %62 : vector<4x1xf32> to vector<4x256xf32>
    %64 = arith.mulf %61, %63 : vector<4x256xf32>
    %c8_32 = arith.constant 8 : index
    %c0_33 = arith.constant 0 : index
    %65 = vector.load %arg3[%c8_32, %c0_33] : memref<36x1xf32, #tpu.memory_space<vmem>>, vector<4x1xf32>
    %66 = vector.broadcast %65 : vector<4x1xf32> to vector<4x256xf32>
    %67 = arith.addf %64, %66 : vector<4x256xf32>
    %68 = arith.negf %67 : vector<4x256xf32>
    %69 = math.exp %68 : vector<4x256xf32>
    %cst_34 = arith.constant 1.000000e+00 : f32
    %70 = vector.broadcast %cst_34 : f32 to vector<4x256xf32>
    %71 = arith.addf %70, %69 : vector<4x256xf32>
    %72 = arith.divf %70, %71 : vector<4x256xf32>
    %73 = arith.mulf %72, %48 : vector<4x256xf32>
    %74 = arith.subf %48, %73 : vector<4x256xf32>
    %75 = arith.truncf %73 : vector<4x256xf32> to vector<4x256xbf16>
    %c8_35 = arith.constant 8 : index
    %c0_36 = arith.constant 0 : index
    %76 = vector.load %arg4[%c8_35, %c0_36] : memref<36x256xbf16, #tpu.memory_space<vmem>>, vector<4x256xbf16>
    tpu.vector_store %arg4[%c8_35, %c0_36], %75 {strides = array<i32>} : memref<36x256xbf16, #tpu.memory_space<vmem>>, vector<4x256xbf16>,
    %77 = arith.mulf %73, %61 : vector<4x256xf32>
    %78 = arith.addf %52, %77 : vector<4x256xf32>
    %cst_37 = arith.constant 0.000000e+00 : f32
    %79 = vector.broadcast %cst_37 : f32 to vector<4x256xf32>
    %80 = arith.select %4, %73, %79 : vector<4x256xi1>, vector<4x256xf32>
    %cst_38 = arith.constant dense<0.000000e+00> : vector<4xf32>
    %81 = vector.multi_reduction <add>, %80, %cst_38 [1] : vector<4x256xf32> to vector<4xf32>
    %c0_39 = arith.constant 0 : index
    %c2 = arith.constant 2 : index
    %c0_40 = arith.constant 0 : index
    %82 = vector.load %arg6[%c0_39, %c2, %c0_40] : memref<1x9x4xf32, #tpu.memory_space<vmem>>, vector<1x1x4xf32>
    %83 = vector.shape_cast %82 : vector<1x1x4xf32> to vector<4xf32>
    %84 = vector.shape_cast %81 : vector<4xf32> to vector<1x1x4xf32>
    tpu.vector_store %arg6[%c0_39, %c2, %c0_40], %84 {strides = array<i32>} : memref<1x9x4xf32, #tpu.memory_space<vmem>>, vector<1x1x4xf32>,
    %c12 = arith.constant 12 : index
    %c0_41 = arith.constant 0 : index
    %85 = vector.load %arg1[%c12, %c0_41] : memref<36x256xf32, #tpu.memory_space<vmem>>, vector<4x256xf32>
    %cst_42 = arith.constant 0.000000e+00 : f32
    %86 = vector.broadcast %cst_42 : f32 to vector<4x256xf32>
    %87 = arith.select %4, %85, %86 : vector<4x256xi1>, vector<4x256xf32>
    %c12_43 = arith.constant 12 : index
    %c0_44 = arith.constant 0 : index
    %88 = vector.load %arg2[%c12_43, %c0_44] : memref<36x1xf32, #tpu.memory_space<vmem>>, vector<4x1xf32>
    %89 = vector.broadcast %88 : vector<4x1xf32> to vector<4x256xf32>
    %90 = arith.mulf %87, %89 : vector<4x256xf32>
    %c12_45 = arith.constant 12 : index
    %c0_46 = arith.constant 0 : index
    %91 = vector.load %arg3[%c12_45, %c0_46] : memref<36x1xf32, #tpu.memory_space<vmem>>, vector<4x1xf32>
    %92 = vector.broadcast %91 : vector<4x1xf32> to vector<4x256xf32>
    %93 = arith.addf %90, %92 : vector<4x256xf32>
    %94 = arith.negf %93 : vector<4x256xf32>
    %95 = math.exp %94 : vector<4x256xf32>
    %cst_47 = arith.constant 1.000000e+00 : f32
    %96 = vector.broadcast %cst_47 : f32 to vector<4x256xf32>
    %97 = arith.addf %96, %95 : vector<4x256xf32>
    %98 = arith.divf %96, %97 : vector<4x256xf32>
    %99 = arith.mulf %98, %74 : vector<4x256xf32>
    %100 = arith.subf %74, %99 : vector<4x256xf32>
    %101 = arith.truncf %99 : vector<4x256xf32> to vector<4x256xbf16>
    %c12_48 = arith.constant 12 : index
    %c0_49 = arith.constant 0 : index
    %102 = vector.load %arg4[%c12_48, %c0_49] : memref<36x256xbf16, #tpu.memory_space<vmem>>, vector<4x256xbf16>
    tpu.vector_store %arg4[%c12_48, %c0_49], %101 {strides = array<i32>} : memref<36x256xbf16, #tpu.memory_space<vmem>>, vector<4x256xbf16>,
    %103 = arith.mulf %99, %87 : vector<4x256xf32>
    %104 = arith.addf %78, %103 : vector<4x256xf32>
    %cst_50 = arith.constant 0.000000e+00 : f32
    %105 = vector.broadcast %cst_50 : f32 to vector<4x256xf32>
    %106 = arith.select %4, %99, %105 : vector<4x256xi1>, vector<4x256xf32>
    %cst_51 = arith.constant dense<0.000000e+00> : vector<4xf32>
    %107 = vector.multi_reduction <add>, %106, %cst_51 [1] : vector<4x256xf32> to vector<4xf32>
    %c0_52 = arith.constant 0 : index
    %c3 = arith.constant 3 : index
    %c0_53 = arith.constant 0 : index
    %108 = vector.load %arg6[%c0_52, %c3, %c0_53] : memref<1x9x4xf32, #tpu.memory_space<vmem>>, vector<1x1x4xf32>
    %109 = vector.shape_cast %108 : vector<1x1x4xf32> to vector<4xf32>
    %110 = vector.shape_cast %107 : vector<4xf32> to vector<1x1x4xf32>
    tpu.vector_store %arg6[%c0_52, %c3, %c0_53], %110 {strides = array<i32>} : memref<1x9x4xf32, #tpu.memory_space<vmem>>, vector<1x1x4xf32>,
    %c16 = arith.constant 16 : index
    %c0_54 = arith.constant 0 : index
    %111 = vector.load %arg1[%c16, %c0_54] : memref<36x256xf32, #tpu.memory_space<vmem>>, vector<4x256xf32>
    %cst_55 = arith.constant 0.000000e+00 : f32
    %112 = vector.broadcast %cst_55 : f32 to vector<4x256xf32>
    %113 = arith.select %4, %111, %112 : vector<4x256xi1>, vector<4x256xf32>
    %c16_56 = arith.constant 16 : index
    %c0_57 = arith.constant 0 : index
    %114 = vector.load %arg2[%c16_56, %c0_57] : memref<36x1xf32, #tpu.memory_space<vmem>>, vector<4x1xf32>
    %115 = vector.broadcast %114 : vector<4x1xf32> to vector<4x256xf32>
    %116 = arith.mulf %113, %115 : vector<4x256xf32>
    %c16_58 = arith.constant 16 : index
    %c0_59 = arith.constant 0 : index
    %117 = vector.load %arg3[%c16_58, %c0_59] : memref<36x1xf32, #tpu.memory_space<vmem>>, vector<4x1xf32>
    %118 = vector.broadcast %117 : vector<4x1xf32> to vector<4x256xf32>
    %119 = arith.addf %116, %118 : vector<4x256xf32>
    %120 = arith.negf %119 : vector<4x256xf32>
    %121 = math.exp %120 : vector<4x256xf32>
    %cst_60 = arith.constant 1.000000e+00 : f32
    %122 = vector.broadcast %cst_60 : f32 to vector<4x256xf32>
    %123 = arith.addf %122, %121 : vector<4x256xf32>
    %124 = arith.divf %122, %123 : vector<4x256xf32>
    %125 = arith.mulf %124, %100 : vector<4x256xf32>
    %126 = arith.subf %100, %125 : vector<4x256xf32>
    %127 = arith.truncf %125 : vector<4x256xf32> to vector<4x256xbf16>
    %c16_61 = arith.constant 16 : index
    %c0_62 = arith.constant 0 : index
    %128 = vector.load %arg4[%c16_61, %c0_62] : memref<36x256xbf16, #tpu.memory_space<vmem>>, vector<4x256xbf16>
    tpu.vector_store %arg4[%c16_61, %c0_62], %127 {strides = array<i32>} : memref<36x256xbf16, #tpu.memory_space<vmem>>, vector<4x256xbf16>,
    %129 = arith.mulf %125, %113 : vector<4x256xf32>
    %130 = arith.addf %104, %129 : vector<4x256xf32>
    %cst_63 = arith.constant 0.000000e+00 : f32
    %131 = vector.broadcast %cst_63 : f32 to vector<4x256xf32>
    %132 = arith.select %4, %125, %131 : vector<4x256xi1>, vector<4x256xf32>
    %cst_64 = arith.constant dense<0.000000e+00> : vector<4xf32>
    %133 = vector.multi_reduction <add>, %132, %cst_64 [1] : vector<4x256xf32> to vector<4xf32>
    %c0_65 = arith.constant 0 : index
    %c4_66 = arith.constant 4 : index
    %c0_67 = arith.constant 0 : index
    %134 = vector.load %arg6[%c0_65, %c4_66, %c0_67] : memref<1x9x4xf32, #tpu.memory_space<vmem>>, vector<1x1x4xf32>
    %135 = vector.shape_cast %134 : vector<1x1x4xf32> to vector<4xf32>
    %136 = vector.shape_cast %133 : vector<4xf32> to vector<1x1x4xf32>
    tpu.vector_store %arg6[%c0_65, %c4_66, %c0_67], %136 {strides = array<i32>} : memref<1x9x4xf32, #tpu.memory_space<vmem>>, vector<1x1x4xf32>,
    %c20 = arith.constant 20 : index
    %c0_68 = arith.constant 0 : index
    %137 = vector.load %arg1[%c20, %c0_68] : memref<36x256xf32, #tpu.memory_space<vmem>>, vector<4x256xf32>
    %cst_69 = arith.constant 0.000000e+00 : f32
    %138 = vector.broadcast %cst_69 : f32 to vector<4x256xf32>
    %139 = arith.select %4, %137, %138 : vector<4x256xi1>, vector<4x256xf32>
    %c20_70 = arith.constant 20 : index
    %c0_71 = arith.constant 0 : index
    %140 = vector.load %arg2[%c20_70, %c0_71] : memref<36x1xf32, #tpu.memory_space<vmem>>, vector<4x1xf32>
    %141 = vector.broadcast %140 : vector<4x1xf32> to vector<4x256xf32>
    %142 = arith.mulf %139, %141 : vector<4x256xf32>
    %c20_72 = arith.constant 20 : index
    %c0_73 = arith.constant 0 : index
    %143 = vector.load %arg3[%c20_72, %c0_73] : memref<36x1xf32, #tpu.memory_space<vmem>>, vector<4x1xf32>
    %144 = vector.broadcast %143 : vector<4x1xf32> to vector<4x256xf32>
    %145 = arith.addf %142, %144 : vector<4x256xf32>
    %146 = arith.negf %145 : vector<4x256xf32>
    %147 = math.exp %146 : vector<4x256xf32>
    %cst_74 = arith.constant 1.000000e+00 : f32
    %148 = vector.broadcast %cst_74 : f32 to vector<4x256xf32>
    %149 = arith.addf %148, %147 : vector<4x256xf32>
    %150 = arith.divf %148, %149 : vector<4x256xf32>
    %151 = arith.mulf %150, %126 : vector<4x256xf32>
    %152 = arith.subf %126, %151 : vector<4x256xf32>
    %153 = arith.truncf %151 : vector<4x256xf32> to vector<4x256xbf16>
    %c20_75 = arith.constant 20 : index
    %c0_76 = arith.constant 0 : index
    %154 = vector.load %arg4[%c20_75, %c0_76] : memref<36x256xbf16, #tpu.memory_space<vmem>>, vector<4x256xbf16>
    tpu.vector_store %arg4[%c20_75, %c0_76], %153 {strides = array<i32>} : memref<36x256xbf16, #tpu.memory_space<vmem>>, vector<4x256xbf16>,
    %155 = arith.mulf %151, %139 : vector<4x256xf32>
    %156 = arith.addf %130, %155 : vector<4x256xf32>
    %cst_77 = arith.constant 0.000000e+00 : f32
    %157 = vector.broadcast %cst_77 : f32 to vector<4x256xf32>
    %158 = arith.select %4, %151, %157 : vector<4x256xi1>, vector<4x256xf32>
    %cst_78 = arith.constant dense<0.000000e+00> : vector<4xf32>
    %159 = vector.multi_reduction <add>, %158, %cst_78 [1] : vector<4x256xf32> to vector<4xf32>
    %c0_79 = arith.constant 0 : index
    %c5 = arith.constant 5 : index
    %c0_80 = arith.constant 0 : index
    %160 = vector.load %arg6[%c0_79, %c5, %c0_80] : memref<1x9x4xf32, #tpu.memory_space<vmem>>, vector<1x1x4xf32>
    %161 = vector.shape_cast %160 : vector<1x1x4xf32> to vector<4xf32>
    %162 = vector.shape_cast %159 : vector<4xf32> to vector<1x1x4xf32>
    tpu.vector_store %arg6[%c0_79, %c5, %c0_80], %162 {strides = array<i32>} : memref<1x9x4xf32, #tpu.memory_space<vmem>>, vector<1x1x4xf32>,
    %c24 = arith.constant 24 : index
    %c0_81 = arith.constant 0 : index
    %163 = vector.load %arg1[%c24, %c0_81] : memref<36x256xf32, #tpu.memory_space<vmem>>, vector<4x256xf32>
    %cst_82 = arith.constant 0.000000e+00 : f32
    %164 = vector.broadcast %cst_82 : f32 to vector<4x256xf32>
    %165 = arith.select %4, %163, %164 : vector<4x256xi1>, vector<4x256xf32>
    %c24_83 = arith.constant 24 : index
    %c0_84 = arith.constant 0 : index
    %166 = vector.load %arg2[%c24_83, %c0_84] : memref<36x1xf32, #tpu.memory_space<vmem>>, vector<4x1xf32>
    %167 = vector.broadcast %166 : vector<4x1xf32> to vector<4x256xf32>
    %168 = arith.mulf %165, %167 : vector<4x256xf32>
    %c24_85 = arith.constant 24 : index
    %c0_86 = arith.constant 0 : index
    %169 = vector.load %arg3[%c24_85, %c0_86] : memref<36x1xf32, #tpu.memory_space<vmem>>, vector<4x1xf32>
    %170 = vector.broadcast %169 : vector<4x1xf32> to vector<4x256xf32>
    %171 = arith.addf %168, %170 : vector<4x256xf32>
    %172 = arith.negf %171 : vector<4x256xf32>
    %173 = math.exp %172 : vector<4x256xf32>
    %cst_87 = arith.constant 1.000000e+00 : f32
    %174 = vector.broadcast %cst_87 : f32 to vector<4x256xf32>
    %175 = arith.addf %174, %173 : vector<4x256xf32>
    %176 = arith.divf %174, %175 : vector<4x256xf32>
    %177 = arith.mulf %176, %152 : vector<4x256xf32>
    %178 = arith.subf %152, %177 : vector<4x256xf32>
    %179 = arith.truncf %177 : vector<4x256xf32> to vector<4x256xbf16>
    %c24_88 = arith.constant 24 : index
    %c0_89 = arith.constant 0 : index
    %180 = vector.load %arg4[%c24_88, %c0_89] : memref<36x256xbf16, #tpu.memory_space<vmem>>, vector<4x256xbf16>
    tpu.vector_store %arg4[%c24_88, %c0_89], %179 {strides = array<i32>} : memref<36x256xbf16, #tpu.memory_space<vmem>>, vector<4x256xbf16>,
    %181 = arith.mulf %177, %165 : vector<4x256xf32>
    %182 = arith.addf %156, %181 : vector<4x256xf32>
    %cst_90 = arith.constant 0.000000e+00 : f32
    %183 = vector.broadcast %cst_90 : f32 to vector<4x256xf32>
    %184 = arith.select %4, %177, %183 : vector<4x256xi1>, vector<4x256xf32>
    %cst_91 = arith.constant dense<0.000000e+00> : vector<4xf32>
    %185 = vector.multi_reduction <add>, %184, %cst_91 [1] : vector<4x256xf32> to vector<4xf32>
    %c0_92 = arith.constant 0 : index
    %c6 = arith.constant 6 : index
    %c0_93 = arith.constant 0 : index
    %186 = vector.load %arg6[%c0_92, %c6, %c0_93] : memref<1x9x4xf32, #tpu.memory_space<vmem>>, vector<1x1x4xf32>
    %187 = vector.shape_cast %186 : vector<1x1x4xf32> to vector<4xf32>
    %188 = vector.shape_cast %185 : vector<4xf32> to vector<1x1x4xf32>
    tpu.vector_store %arg6[%c0_92, %c6, %c0_93], %188 {strides = array<i32>} : memref<1x9x4xf32, #tpu.memory_space<vmem>>, vector<1x1x4xf32>,
    %c28 = arith.constant 28 : index
    %c0_94 = arith.constant 0 : index
    %189 = vector.load %arg1[%c28, %c0_94] : memref<36x256xf32, #tpu.memory_space<vmem>>, vector<4x256xf32>
    %cst_95 = arith.constant 0.000000e+00 : f32
    %190 = vector.broadcast %cst_95 : f32 to vector<4x256xf32>
    %191 = arith.select %4, %189, %190 : vector<4x256xi1>, vector<4x256xf32>
    %c28_96 = arith.constant 28 : index
    %c0_97 = arith.constant 0 : index
    %192 = vector.load %arg2[%c28_96, %c0_97] : memref<36x1xf32, #tpu.memory_space<vmem>>, vector<4x1xf32>
    %193 = vector.broadcast %192 : vector<4x1xf32> to vector<4x256xf32>
    %194 = arith.mulf %191, %193 : vector<4x256xf32>
    %c28_98 = arith.constant 28 : index
    %c0_99 = arith.constant 0 : index
    %195 = vector.load %arg3[%c28_98, %c0_99] : memref<36x1xf32, #tpu.memory_space<vmem>>, vector<4x1xf32>
    %196 = vector.broadcast %195 : vector<4x1xf32> to vector<4x256xf32>
    %197 = arith.addf %194, %196 : vector<4x256xf32>
    %198 = arith.negf %197 : vector<4x256xf32>
    %199 = math.exp %198 : vector<4x256xf32>
    %cst_100 = arith.constant 1.000000e+00 : f32
    %200 = vector.broadcast %cst_100 : f32 to vector<4x256xf32>
    %201 = arith.addf %200, %199 : vector<4x256xf32>
    %202 = arith.divf %200, %201 : vector<4x256xf32>
    %203 = arith.mulf %202, %178 : vector<4x256xf32>
    %204 = arith.subf %178, %203 : vector<4x256xf32>
    %205 = arith.truncf %203 : vector<4x256xf32> to vector<4x256xbf16>
    %c28_101 = arith.constant 28 : index
    %c0_102 = arith.constant 0 : index
    %206 = vector.load %arg4[%c28_101, %c0_102] : memref<36x256xbf16, #tpu.memory_space<vmem>>, vector<4x256xbf16>
    tpu.vector_store %arg4[%c28_101, %c0_102], %205 {strides = array<i32>} : memref<36x256xbf16, #tpu.memory_space<vmem>>, vector<4x256xbf16>,
    %207 = arith.mulf %203, %191 : vector<4x256xf32>
    %208 = arith.addf %182, %207 : vector<4x256xf32>
    %cst_103 = arith.constant 0.000000e+00 : f32
    %209 = vector.broadcast %cst_103 : f32 to vector<4x256xf32>
    %210 = arith.select %4, %203, %209 : vector<4x256xi1>, vector<4x256xf32>
    %cst_104 = arith.constant dense<0.000000e+00> : vector<4xf32>
    %211 = vector.multi_reduction <add>, %210, %cst_104 [1] : vector<4x256xf32> to vector<4xf32>
    %c0_105 = arith.constant 0 : index
    %c7 = arith.constant 7 : index
    %c0_106 = arith.constant 0 : index
    %212 = vector.load %arg6[%c0_105, %c7, %c0_106] : memref<1x9x4xf32, #tpu.memory_space<vmem>>, vector<1x1x4xf32>
    %213 = vector.shape_cast %212 : vector<1x1x4xf32> to vector<4xf32>
    %214 = vector.shape_cast %211 : vector<4xf32> to vector<1x1x4xf32>
    tpu.vector_store %arg6[%c0_105, %c7, %c0_106], %214 {strides = array<i32>} : memref<1x9x4xf32, #tpu.memory_space<vmem>>, vector<1x1x4xf32>,
    %c32 = arith.constant 32 : index
    %c0_107 = arith.constant 0 : index
    %215 = vector.load %arg1[%c32, %c0_107] : memref<36x256xf32, #tpu.memory_space<vmem>>, vector<4x256xf32>
    %cst_108 = arith.constant 0.000000e+00 : f32
    %216 = vector.broadcast %cst_108 : f32 to vector<4x256xf32>
    %217 = arith.select %4, %215, %216 : vector<4x256xi1>, vector<4x256xf32>
    %218 = arith.truncf %204 : vector<4x256xf32> to vector<4x256xbf16>
    %c32_109 = arith.constant 32 : index
    %c0_110 = arith.constant 0 : index
    %219 = vector.load %arg4[%c32_109, %c0_110] : memref<36x256xbf16, #tpu.memory_space<vmem>>, vector<4x256xbf16>
    tpu.vector_store %arg4[%c32_109, %c0_110], %218 {strides = array<i32>} : memref<36x256xbf16, #tpu.memory_space<vmem>>, vector<4x256xbf16>,
    %220 = arith.mulf %204, %217 : vector<4x256xf32>
    %221 = arith.addf %208, %220 : vector<4x256xf32>
    %cst_111 = arith.constant 0.000000e+00 : f32
    %222 = vector.broadcast %cst_111 : f32 to vector<4x256xf32>
    %223 = arith.select %4, %204, %222 : vector<4x256xi1>, vector<4x256xf32>
    %cst_112 = arith.constant dense<0.000000e+00> : vector<4xf32>
    %224 = vector.multi_reduction <add>, %223, %cst_112 [1] : vector<4x256xf32> to vector<4xf32>
    %c0_113 = arith.constant 0 : index
    %c8_114 = arith.constant 8 : index
    %c0_115 = arith.constant 0 : index
    %225 = vector.load %arg6[%c0_113, %c8_114, %c0_115] : memref<1x9x4xf32, #tpu.memory_space<vmem>>, vector<1x1x4xf32>
    %226 = vector.shape_cast %225 : vector<1x1x4xf32> to vector<4xf32>
    %227 = vector.shape_cast %224 : vector<4xf32> to vector<1x1x4xf32>
    tpu.vector_store %arg6[%c0_113, %c8_114, %c0_115], %227 {strides = array<i32>} : memref<1x9x4xf32, #tpu.memory_space<vmem>>, vector<1x1x4xf32>,
    %cst_116 = arith.constant dense<0.000000e+00> : vector<4xf32>
    %228 = vector.multi_reduction <add>, %221, %cst_116 [1] : vector<4x256xf32> to vector<4xf32>
    %c0_117 = arith.constant 0 : index
    %c0_118 = arith.constant 0 : index
    %c0_119 = arith.constant 0 : index
    %229 = vector.load %arg5[%c0_117, %c0_118, %c0_119] : memref<1x1x4xf32, #tpu.memory_space<vmem>>, vector<1x1x4xf32>
    %230 = vector.shape_cast %229 : vector<1x1x4xf32> to vector<4xf32>
    %231 = vector.shape_cast %228 : vector<4xf32> to vector<1x1x4xf32>
    tpu.vector_store %arg5[%c0_117, %c0_118, %c0_119], %231 {strides = array<i32>} : memref<1x1x4xf32, #tpu.memory_space<vmem>>, vector<1x1x4xf32>,
    return
  }
  func.func @transform_0(%arg0: i32) -> (i32, i32) {
    %c0_i32 = arith.constant 0 : i32
    %c0_i32_0 = arith.constant 0 : i32
    return %c0_i32, %arg0 : i32, i32
  }
  func.func @transform_1(%arg0: i32) -> (i32, i32) {
    %c0_i32 = arith.constant 0 : i32
    %c0_i32_0 = arith.constant 0 : i32
    %c0_i32_1 = arith.constant 0 : i32
    return %c0_i32, %c0_i32_0 : i32, i32
  }
  func.func @transform_2(%arg0: i32) -> (i32, i32) {
    %c0_i32 = arith.constant 0 : i32
    %c0_i32_0 = arith.constant 0 : i32
    %c0_i32_1 = arith.constant 0 : i32
    return %c0_i32, %c0_i32_0 : i32, i32
  }
  func.func @transform_3(%arg0: i32) -> (i32, i32) {
    %c0_i32 = arith.constant 0 : i32
    %c0_i32_0 = arith.constant 0 : i32
    return %c0_i32, %arg0 : i32, i32
  }
  func.func @transform_4(%arg0: i32) -> (i32, i32, i32) {
    %c0_i32 = arith.constant 0 : i32
    %c0_i32_0 = arith.constant 0 : i32
    %c0_i32_1 = arith.constant 0 : i32
    return %arg0, %c0_i32, %c0_i32_0 : i32, i32, i32
  }
  func.func @transform_5(%arg0: i32) -> (i32, i32, i32) {
    %c0_i32 = arith.constant 0 : i32
    %c0_i32_0 = arith.constant 0 : i32
    %c0_i32_1 = arith.constant 0 : i32
    return %arg0, %c0_i32, %c0_i32_0 : i32, i32, i32
  }
}

</mosaic_0001>

<llo_original>
// kernel: tpu_custom_call.1
$region0: #{tpu_custom_call.1}
  #allocation0 [shape = 'u32[]', space=smem, size = 0x4, offset = 0x4, fixed_abs, tag = 'smem constant byte address 0x4 - core index']
  #allocation1 [shape = 'u32[144,128]{1,0:T(1,128)}', space=vmem, size = 0x12000, scoped, tag = 'internal scratch']
  %s0 = inlined_call_operand.hbm [shape: f32[36,300], index: 0, kind: input, shape index: {}]
  %s1 = inlined_call_operand.vmem [shape: f32[36,1], index: 1, kind: input, shape index: {}]
  %s2 = inlined_call_operand.vmem [shape: f32[36,1], index: 2, kind: input, shape index: {}]
  %s3 = inlined_call_operand.hbm [shape: bf16[36,300], index: 3, kind: output, shape index: {0}]
  %s4 = inlined_call_operand.hbm [shape: f32[2,1,4], index: 4, kind: output, shape index: {1}]
  %s5 = inlined_call_operand.vmem [shape: f32[2,9,4], index: 5, kind: output, shape index: {2}]
  %6 = xla_tuple %s3, %s4, %s5
  %s7 = sld [smem:[#allocation0]]
  $region65: #{tpu_custom_call.1} parent=0
    _
  %s9 = ssub.s32 1, %s7
  %s10 = scalar_select 0, %s9, %s7
  $region1: #{tpu_custom_call.1} parent=0
    #allocation2 [shape = 'u8[81920]{0}', space=vmem, size = 0x14000, scoped, tag = 'input window, operand 0']
    #allocation3 [shape = 's32[2]{0}', space=sflag, size = 0x8, scoped, tag = 'scoped memory for tpu_custom_call.1']
    #allocation4 [shape = 's32[2]{0}', space=sflag, size = 0x8, scoped, tag = 'scoped memory for tpu_custom_call.1']
    #allocation5 [shape = 'u8[40960]{0}', space=vmem, size = 0xa000, scoped, tag = 'output window, operand 0']
    #allocation6 [shape = 'u8[1024]{0}', space=vmem, size = 0x400, scoped, tag = 'output window, operand 1']
    #allocation7 [shape = 's32[2]{0}', space=sflag, size = 0x8, scoped, tag = 'scoped memory for tpu_custom_call.1']
    %11 = vsyncpa [#allocation3], 0
    %s12 = scalar_lea.sflag [#allocation3], 1
    %13 = vsyncpa %s12, 0
    %14 = vsyncpa [#allocation4], 0
    %s15 = scalar_lea.sflag [#allocation4], 1
    %16 = vsyncpa %s15, 0
    %17 = vsyncpa [#allocation7], 0
    %s18 = scalar_lea.sflag [#allocation7], 1
    %19 = vsyncpa %s18, 0
    loop: start=0, step=1, limit=4
    $region2: #{tpu_custom_call.1} parent=1 // loop_pre_header
      _
    $region3: #{tpu_custom_call.1} parent=1 // loop_header
      %s21 = sphi 0, %s25
      %p22 = scmp.ge.s32.totalorder %s21, 4
      %s31 = sphi 0, %s33
      %s34 = sphi 0, %s31
      %s35 = sphi 0, %s34
      %s51 = sphi 0, %s35
      %s55 = sphi 0, %s55
      %s57 = sphi 0, %s55
      %s58 = sphi 0, %s57
      %s72 = sphi 0, %s58
      %s76 = sphi 0, %s76
      %s78 = sphi 0, %s76
      %s79 = sphi 0, %s78
      %s93 = sphi 0, %s79
      %s99 = sphi 0, %s101
      %s102 = sphi 0, %s99
      %s103 = sphi 0, %s102
      %s119 = sphi 0, %s103
      %s125 = sphi 0, %s127
      %s128 = sphi 0, %s125
      %s129 = sphi 0, %s128
      %s145 = sphi 0, %s129
      %s151 = sphi 0, %s153
      %s154 = sphi 0, %s151
      %s155 = sphi 0, %s154
      %s171 = sphi 0, %s155
    $region4: #{tpu_custom_call.1} parent=1 // loop_header_branch
      %24 = sbr.rel (%p22) target = $region8
    $region5: #{tpu_custom_call.1} parent=1 // loop_body
      %s26 = ssub.s32 %s21, 1
      %s27 = ssub.s32 %s21, 2
      %s28 = sadd.s32 %s21, 1
      %s29 = ssub.s32 %s21, %s28
      %p30 = scmp.eq.s32.totalorder %s29, 0
      %s32 = sadd.s32 %s31, 1
      %s33 = scalar_select %p30, %s31, %s32
      %p36 = pneg %p30
      %p37 = scmp.eq.s32.totalorder %s21, 1
      %p38 = por %p36, %p37
      %p39 = scmp.ne.s32.totalorder %s31, %s34
      %p40 = scmp.eq.s32.totalorder %s21, 0
      %p41 = por %p39, %p40
      %p42 = scmp.ne.s32.totalorder %s31, %s34
      %p43 = scmp.eq.s32.totalorder %s26, 1
      %p44 = por %p42, %p43
      %p45 = scmp.ne.s32.totalorder %s34, %s35
      %p46 = scmp.eq.s32.totalorder %s26, 0
      %p47 = por %p45, %p46
      %p48 = scmp.ne.s32.totalorder %s34, %s35
      %p49 = scmp.eq.s32.totalorder %s27, 1
      %p50 = por %p48, %p49
      %p52 = scmp.ne.s32.totalorder %s35, %s51
      %p53 = scmp.eq.s32.totalorder %s27, 0
      %p54 = por %p52, %p53
      %s56 = sadd.s32 %s55, 1
      %p59 = scmp.eq.s32.totalorder %s21, 1
      %p60 = scmp.ne.s32.totalorder %s55, %s57
      %p61 = scmp.eq.s32.totalorder %s21, 0
      %p62 = por %p60, %p61
      %p63 = scmp.ne.s32.totalorder %s55, %s57
      %p64 = scmp.eq.s32.totalorder %s26, 1
      %p65 = por %p63, %p64
      %p66 = scmp.ne.s32.totalorder %s57, %s58
      %p67 = scmp.eq.s32.totalorder %s26, 0
      %p68 = por %p66, %p67
      %p69 = scmp.ne.s32.totalorder %s57, %s58
      %p70 = scmp.eq.s32.totalorder %s27, 1
      %p71 = por %p69, %p70
      %p73 = scmp.ne.s32.totalorder %s58, %s72
      %p74 = scmp.eq.s32.totalorder %s27, 0
      %p75 = por %p73, %p74
      %s77 = sadd.s32 %s76, 1
      %p80 = scmp.eq.s32.totalorder %s21, 1
      %p81 = scmp.ne.s32.totalorder %s76, %s78
      %p82 = scmp.eq.s32.totalorder %s21, 0
      %p83 = por %p81, %p82
      %p84 = scmp.ne.s32.totalorder %s76, %s78
      %p85 = scmp.eq.s32.totalorder %s26, 1
      %p86 = por %p84, %p85
      %p87 = scmp.ne.s32.totalorder %s78, %s79
      %p88 = scmp.eq.s32.totalorder %s26, 0
      %p89 = por %p87, %p88
      %p90 = scmp.ne.s32.totalorder %s78, %s79
      %p91 = scmp.eq.s32.totalorder %s27, 1
      %p92 = por %p90, %p91
      %p94 = scmp.ne.s32.totalorder %s79, %s93
      %p95 = scmp.eq.s32.totalorder %s27, 0
      %p96 = por %p94, %p95
      %s97 = ssub.s32 %s21, %s28
      %p98 = scmp.eq.s32.totalorder %s97, 0
      %s100 = sadd.s32 %s99, 1
      %s101 = scalar_select %p98, %s99, %s100
      %p104 = pneg %p98
      %p105 = scmp.eq.s32.totalorder %s21, 1
      %p106 = por %p104, %p105
      %p107 = scmp.ne.s32.totalorder %s99, %s102
      %p108 = scmp.eq.s32.totalorder %s21, 0
      %p109 = por %p107, %p108
      %p110 = scmp.ne.s32.totalorder %s99, %s102
      %p111 = scmp.eq.s32.totalorder %s26, 1
      %p112 = por %p110, %p111
      %p113 = scmp.ne.s32.totalorder %s102, %s103
      %p114 = scmp.eq.s32.totalorder %s26, 0
      %p115 = por %p113, %p114
      %p116 = scmp.ne.s32.totalorder %s102, %s103
      %p117 = scmp.eq.s32.totalorder %s27, 1
      %p118 = por %p116, %p117
      %p120 = scmp.ne.s32.totalorder %s103, %s119
      %p121 = scmp.eq.s32.totalorder %s27, 0
      %p122 = por %p120, %p121
      %s123 = ssub.s32 %s21, %s28
      %p124 = scmp.eq.s32.totalorder %s123, 0
      %s126 = sadd.s32 %s125, 1
      %s127 = scalar_select %p124, %s125, %s126
      %p130 = pneg %p124
      %p131 = scmp.eq.s32.totalorder %s21, 1
      %p132 = por %p130, %p131
      %p133 = scmp.ne.s32.totalorder %s125, %s128
      %p134 = scmp.eq.s32.totalorder %s21, 0
      %p135 = por %p133, %p134
      %p136 = scmp.ne.s32.totalorder %s125, %s128
      %p137 = scmp.eq.s32.totalorder %s26, 1
      %p138 = por %p136, %p137
      %p139 = scmp.ne.s32.totalorder %s128, %s129
      %p140 = scmp.eq.s32.totalorder %s26, 0
      %p141 = por %p139, %p140
      %p142 = scmp.ne.s32.totalorder %s128, %s129
      %p143 = scmp.eq.s32.totalorder %s27, 1
      %p144 = por %p142, %p143
      %p146 = scmp.ne.s32.totalorder %s129, %s145
      %p147 = scmp.eq.s32.totalorder %s27, 0
      %p148 = por %p146, %p147
      %s149 = ssub.s32 %s21, %s28
      %p150 = scmp.eq.s32.totalorder %s149, 0
      %s152 = sadd.s32 %s151, 1
      %s153 = scalar_select %p150, %s151, %s152
      %p156 = pneg %p150
      %p157 = scmp.eq.s32.totalorder %s21, 1
      %p158 = por %p156, %p157
      %p159 = scmp.ne.s32.totalorder %s151, %s154
      %p160 = scmp.eq.s32.totalorder %s21, 0
      %p161 = por %p159, %p160
      %p162 = scmp.ne.s32.totalorder %s151, %s154
      %p163 = scmp.eq.s32.totalorder %s26, 1
      %p164 = por %p162, %p163
      %p165 = scmp.ne.s32.totalorder %s154, %s155
      %p166 = scmp.eq.s32.totalorder %s26, 0
      %p167 = por %p165, %p166
      %p168 = scmp.ne.s32.totalorder %s154, %s155
      %p169 = scmp.eq.s32.totalorder %s27, 1
      %p170 = por %p168, %p169
      %p172 = scmp.ne.s32.totalorder %s155, %s171
      %p173 = scmp.eq.s32.totalorder %s27, 0
      %p174 = por %p172, %p173
      %p175 = scmp.le.s32.totalorder 1, %s21
      %p176 = scmp.lt.s32.totalorder %s21, 3
      %p177 = pnand %p175, %p176
      %p178 = pneg %p177
      // Predicated region
      $region9: #{tpu_custom_call.1} parent=5 // pred_check
        _
      $region10: #{tpu_custom_call.1} parent=5 // pred_check_branch
        %180 = sbr.rel (%p177) target = $region12
      $region11: #{tpu_custom_call.1} parent=5 // pred_region
        %s181 = ssub.s32 %s21, 1
        // Predicated region
        $region13: #{tpu_custom_call.1} parent=11 // pred_check
          %p182 = pneg %p68
        $region14: #{tpu_custom_call.1} parent=11 // pred_check_branch
          %184 = sbr.rel (%p182) target = $region16
        $region15: #{tpu_custom_call.1} parent=11 // pred_region
          _
        $region16: #{tpu_custom_call.1} parent=11 // pred_fallthru
          _
        // Predicated region
        $region17: #{tpu_custom_call.1} parent=11 // pred_check
          %p185 = pneg %p89
        $region18: #{tpu_custom_call.1} parent=11 // pred_check_branch
          %187 = sbr.rel (%p185) target = $region20
        $region19: #{tpu_custom_call.1} parent=11 // pred_region
          _
        $region20: #{tpu_custom_call.1} parent=11 // pred_fallthru
          _
      $region12: #{tpu_custom_call.1} parent=5 // pred_fallthru
        _
      %p188 = scmp.lt.s32.totalorder %s21, 2
      // Predicated region
      $region21: #{tpu_custom_call.1} parent=5 // pred_check
        %p189 = pneg %p188
      $region22: #{tpu_custom_call.1} parent=5 // pred_check_branch
        %191 = sbr.rel (%p189) target = $region24
      $region23: #{tpu_custom_call.1} parent=5 // pred_region
        // Predicated region
        $region25: #{tpu_custom_call.1} parent=23 // pred_check
          %p192 = pneg %p41
        $region26: #{tpu_custom_call.1} parent=23 // pred_check_branch
          %194 = sbr.rel (%p192) target = $region28
        $region27: #{tpu_custom_call.1} parent=23 // pred_region
          %s195 = sand.u32 %s31, 1
          %s196 = scalar_lea.sflag [#allocation3], %s195
          %s197 = sand.u32 %s31, 1
          %s198 = smul.addr %s197, 80
          %s199 = scalar_lea.vmem [#allocation2], %s198
          %s200 = smul.u32 2, %s21
          %s201 = ssub.s32 3, %s200
          %p202 = scmp.lt.s32.totalorder %s201, 2
          %s203 = scalar_select %p202, %s201, 2
          %s204 = smul.u32 640, %s203
          %s206 = ssub.s32 1280, %s204
          %207 = vsyncadd %s196, %s206
          %p208 = scmp.ne.s32.totalorder 0, %s204
          %s209 = smul.addr %s200, 128
          %s210 = scalar_lea.hbm %s0, %s209
          %s211 = smul.u32 %s203, 8
          %s212 = smul.u32 %s211, 5
          %s213 = sshll.u32 %s199, 4
          %s214 = int_to_ptr.vmem [resolvable:$true] %s213
          %s215 = sshll.u32 %s212, 4
          %219 = dma.hbm_to_vmem [thread:$0]  (%p208), %s210, %s215, %s214, %s196, 384, 256, %s211
        $region28: #{tpu_custom_call.1} parent=23 // pred_fallthru
          _
      $region24: #{tpu_custom_call.1} parent=5 // pred_fallthru
        _
      %p220 = scmp.le.s32.totalorder 1, %s21
      %p221 = scmp.lt.s32.totalorder %s21, 3
      %p222 = pnand %p220, %p221
      %p223 = pneg %p222
      // Predicated region
      $region29: #{tpu_custom_call.1} parent=5 // pred_check
        _
      $region30: #{tpu_custom_call.1} parent=5 // pred_check_branch
        %225 = sbr.rel (%p222) target = $region32
      $region31: #{tpu_custom_call.1} parent=5 // pred_region
        %s226 = ssub.s32 %s21, 1
        %s227 = sand.u32 %s34, 1
        %s228 = scalar_lea.sflag [#allocation3], %s227
        %s229 = sand.u32 %s34, 1
        %s230 = smul.addr %s229, 80
        %s231 = scalar_lea.vmem [#allocation2], %s230
        // Predicated region
        $region33: #{tpu_custom_call.1} parent=31 // pred_check
          %p232 = pneg %p47
        $region34: #{tpu_custom_call.1} parent=31 // pred_check_branch
          %234 = sbr.rel (%p232) target = $region36
        $region35: #{tpu_custom_call.1} parent=31 // pred_region
          %235 = dma.done %s228, 1280
        $region36: #{tpu_custom_call.1} parent=31 // pred_fallthru
          _
        %s236 = sand.u32 %s34, 1
        %s237 = scalar_lea.sflag [#allocation3], %s236
        %s238 = sand.u32 %s34, 1
        %s239 = smul.addr %s238, 80
        %s240 = scalar_lea.vmem [#allocation2], %s239
        %p241 = pneg %p47
        %p242 = pneg %p44
        %p243 = pneg %p68
        %p244 = pneg %p65
        %p245 = pneg %p89
        %p246 = pneg %p86
        %p247 = pneg %p115
        %p248 = pneg %p112
        %s249 = sand.u32 %s102, 1
        %s250 = scalar_lea.sflag [#allocation4], %s249
        %s251 = sand.u32 %s102, 1
        %s252 = smul.addr %s251, 40
        %s253 = scalar_lea.vmem [#allocation5], %s252
        %p254 = pneg %p141
        %p255 = pneg %p138
        %s256 = sand.u32 %s128, 1
        %s257 = scalar_lea.sflag [#allocation7], %s256
        %s258 = sand.u32 %s128, 1
        %s259 = scalar_lea.vmem [#allocation6], %s258
        %p260 = pneg %p167
        %p261 = pneg %p164
        %p262 = scmp.lt.s32.totalorder %s26, 1
        %s263 = scalar_select %p262, %s26, 1
        %s264 = smul.addr %s263, 2
        %s265 = smul.addr %s264, 8
        %s266 = scalar_lea.vmem %s5, %s265
        %s267 = smul.u32 2, %s26
        %s268 = ssub.s32 3, %s267
        %p269 = scmp.lt.s32.totalorder %s268, 2
        %s270 = scalar_select %p269, %s268, 2
        %s271 = smul.u32 640, %s270
        %s272 = smul.u32 2, %s26
        %s273 = ssub.s32 3, %s272
        %p274 = scmp.lt.s32.totalorder %s273, 2
        %s275 = scalar_select %p274, %s273, 2
        %s276 = smul.u32 320, %s275
        %p277 = scmp.lt.s32.totalorder %s26, 1
        %s278 = scalar_select %p277, %s26, 1
        %s279 = smul.addr %s278, 2
        %s280 = smul.addr %s279, 8
        %s281 = scalar_lea.vmem %s5, %s280
        %s282 = smul.u32 %s26, 256
        %s283 = ssub.s32 300, %s282
        %v284 = vlaneseq
        %v285 = vand.u32 %v284, 127
        %v286 = vadd.s32 %v285, 128
        %v287 = vstv %s283
        %vm288 = vcmp.lt.s32.totalorder %v285, %v287
        %vm289 = vcmp.lt.s32.totalorder %v286, %v287
        %v290 = vld [vmem:[%s231] sm:$0xf]
        %v291 = vld [vmem:[%s231 + $0x8] sm:$0xf]
        %v292 = vsel %vm288, %v290, 0.0
        %v293 = vsel %vm289, %v291, 0.0
        %v294 = vld [vmem:[%s1] sm:$0xf]
        %296 = vset.pattern.permute.xlu0 0
        %297 = vperm.xlu0 %296, %v294
        %v298 = vpop.permute.xlu0 %297
        %v300 = vmul.f32 %v292, %v298
        %v301 = vmul.f32 %v293, %v298
        %v302 = vld [vmem:[%s2] sm:$0xf]
        %304 = vset.pattern.permute.xlu0 0
        %305 = vperm.xlu0 %304, %v302
        %v306 = vpop.permute.xlu0 %305
        %v308 = vadd.f32 %v300, %v306
        %v309 = vadd.f32 %v301, %v306
        %v310 = vxor.u32 %v308, 2147483648
        %v311 = vxor.u32 %v309, 2147483648
        %v312 = vmul.f32 %v310, 1.442695
        %v313 = vpow.pop %v312
        %v314 = vmul.f32 %v311, 1.442695
        %v315 = vpow.pop %v314
        %v316 = vadd.f32 %v313, 1.0
        %v317 = vadd.f32 %v315, 1.0
        %v318 = vrcp.pop %v316
        %v319 = vmul.f32 1.0, %v318
        %v320 = vrcp.pop %v317
        %v321 = vmul.f32 1.0, %v320
        %v322 = vsub.f32 1.0, %v319
        %v323 = vsub.f32 1.0, %v321
        %v324 = vpack.c.bf16 %v319, %v319
        %v325 = vpack.c.bf16 %v321, %v321
        %v328 = vunpack.c.l.b16 %v324
        %v329 = vunpack.c.l.b16 %v325
        %v330 = vpack.c.b16 %v329, %v328
        %332 = vst [vmem:[%s253] sm:$0x33] %v330
        %v333 = vmul.f32 %v319, %v292
        %v334 = vmul.f32 %v321, %v293
        %v335 = vadd.f32 %v333, 0.0
        %v336 = vadd.f32 %v334, 0.0
        %v337 = vsel %vm288, %v319, 0.0
        %v338 = vsel %vm289, %v321, 0.0
        %vm339 = vcmask 1043456
        %v340 = vsel %vm339, %v337, 0.0
        %v341 = vsel %vm339, %v338, 0.0
        %v342 = vadd.f32 %v340, %v341
        %343 = vadd.xlane.f32.xlu0 %v342
        %v344 = vpop.xlane.xlu0 %343
        %v346 = vlaneseq
        %v347 = vshrl.u32 %v346, 7
        %v348 = vsub.s32 %v285, %v347
        %v349 = vrot.slane %v344, %v348
        %vm351 = vcmask 24576
        %352 = vst.msk [vmem:[%s281] sm:$0x1] %vm351, %v349
        %v353 = vld [vmem:[%s231] sm:$0xf0]
        %v354 = vld [vmem:[%s231 + $0x8] sm:$0xf0]
        %v355 = vsel %vm288, %v353, 0.0
        %v356 = vsel %vm289, %v354, 0.0
        %v357 = vld [vmem:[%s1 + $0x4] sm:$0xf]
        %359 = vset.pattern.permute.xlu0 0
        %360 = vperm.xlu0 %359, %v357
        %v361 = vpop.permute.xlu0 %360
        %v362 = vrot.slane %v361, 4
        %v364 = vmul.f32 %v355, %v362
        %v365 = vmul.f32 %v356, %v362
        %v366 = vld [vmem:[%s2 + $0x4] sm:$0xf]
        %368 = vset.pattern.permute.xlu0 0
        %369 = vperm.xlu0 %368, %v366
        %v370 = vpop.permute.xlu0 %369
        %v371 = vrot.slane %v370, 4
        %v373 = vadd.f32 %v364, %v371
        %v374 = vadd.f32 %v365, %v371
        %v375 = vxor.u32 %v373, 2147483648
        %v376 = vxor.u32 %v374, 2147483648
        %v377 = vmul.f32 %v375, 1.442695
        %v378 = vpow.pop %v377
        %v379 = vmul.f32 %v376, 1.442695
        %v380 = vpow.pop %v379
        %v381 = vadd.f32 %v378, 1.0
        %v382 = vadd.f32 %v380, 1.0
        %v383 = vrcp.pop %v381
        %v384 = vmul.f32 1.0, %v383
        %v385 = vrcp.pop %v382
        %v386 = vmul.f32 1.0, %v385
        %v389 = vrot.slane %v322, 4
        %v390 = vrot.slane %v323, 4
        %v393 = vmul.f32 %v384, %v389
        %v394 = vmul.f32 %v386, %v390
        %v397 = vrot.slane %v393, 4
        %v398 = vrot.slane %v394, 4
        %v401 = vsub.f32 %v322, %v397
        %v402 = vsub.f32 %v323, %v398
        %v403 = vpack.c.bf16 %v393, %v393
        %v404 = vpack.c.bf16 %v394, %v394
        %v407 = vunpack.c.l.b16 %v403
        %v408 = vunpack.c.l.b16 %v404
        %v409 = vpack.c.b16 %v408, %v407
        %411 = vst [vmem:[%s253] sm:$0xcc] %v409
        %v412 = vmul.f32 %v393, %v355
        %v413 = vmul.f32 %v394, %v356
        %v416 = vrot.slane %v412, 4
        %v417 = vrot.slane %v413, 4
        %v420 = vadd.f32 %v335, %v416
        %v421 = vadd.f32 %v336, %v417
        %v422 = vsel %vm288, %v393, 0.0
        %v423 = vsel %vm289, %v394, 0.0
        %vm424 = vcmask 1047556
        %v425 = vsel %vm424, %v422, 0.0
        %v426 = vsel %vm424, %v423, 0.0
        %v427 = vadd.f32 %v425, %v426
        %428 = vadd.xlane.f32.xlu0 %v427
        %v429 = vpop.xlane.xlu0 %428
        %v431 = vadd.s32 %v285, 4
        %v432 = vlaneseq
        %v433 = vshrl.u32 %v432, 7
        %v434 = vsub.s32 %v431, %v433
        %v435 = vrot.slane %v429, %v434
        %vm437 = vcmask 28676
        %438 = vst.msk [vmem:[%s281 - $0x3] sm:$0x10] %vm437, %v435
        %v439 = vld [vmem:[%s231 + $0x10] sm:$0xf]
        %v440 = vld [vmem:[%s231 + $0x18] sm:$0xf]
        %v441 = vsel %vm288, %v439, 0.0
        %v442 = vsel %vm289, %v440, 0.0
        %v443 = vld [vmem:[%s1 + $0x8] sm:$0xf]
        %445 = vset.pattern.permute.xlu0 0
        %446 = vperm.xlu0 %445, %v443
        %v447 = vpop.permute.xlu0 %446
        %v449 = vmul.f32 %v441, %v447
        %v450 = vmul.f32 %v442, %v447
        %v451 = vld [vmem:[%s2 + $0x8] sm:$0xf]
        %453 = vset.pattern.permute.xlu0 0
        %454 = vperm.xlu0 %453, %v451
        %v455 = vpop.permute.xlu0 %454
        %v457 = vadd.f32 %v449, %v455
        %v458 = vadd.f32 %v450, %v455
        %v459 = vxor.u32 %v457, 2147483648
        %v460 = vxor.u32 %v458, 2147483648
        %v461 = vmul.f32 %v459, 1.442695
        %v462 = vpow.pop %v461
        %v463 = vmul.f32 %v460, 1.442695
        %v464 = vpow.pop %v463
        %v465 = vadd.f32 %v462, 1.0
        %v466 = vadd.f32 %v464, 1.0
        %v467 = vrcp.pop %v465
        %v468 = vmul.f32 1.0, %v467
        %v469 = vrcp.pop %v466
        %v470 = vmul.f32 1.0, %v469
        %v471 = vmul.f32 %v468, %v401
        %v472 = vmul.f32 %v470, %v402
        %v473 = vsub.f32 %v401, %v471
        %v474 = vsub.f32 %v402, %v472
        %v475 = vpack.c.bf16 %v471, %v471
        %v476 = vpack.c.bf16 %v472, %v472
        %v479 = vunpack.c.l.b16 %v475
        %v480 = vunpack.c.l.b16 %v476
        %v481 = vpack.c.b16 %v480, %v479
        %483 = vst [vmem:[%s253 + $0x8] sm:$0x33] %v481
        %v484 = vmul.f32 %v471, %v441
        %v485 = vmul.f32 %v472, %v442
        %v486 = vadd.f32 %v420, %v484
        %v487 = vadd.f32 %v421, %v485
        %v488 = vsel %vm288, %v471, 0.0
        %v489 = vsel %vm289, %v472, 0.0
        %v490 = vsel %vm339, %v488, 0.0
        %v491 = vsel %vm339, %v489, 0.0
        %v492 = vadd.f32 %v490, %v491
        %493 = vadd.xlane.f32.xlu0 %v492
        %v494 = vpop.xlane.xlu0 %493
        %v496 = vlaneseq
        %v497 = vshrl.u32 %v496, 7
        %v498 = vsub.s32 %v285, %v497
        %v499 = vrot.slane %v494, %v498
        %501 = vst.msk [vmem:[%s281 + $0x2] sm:$0x1] %vm351, %v499
        %v502 = vld [vmem:[%s231 + $0x10] sm:$0xf0]
        %v503 = vld [vmem:[%s231 + $0x18] sm:$0xf0]
        %v504 = vsel %vm288, %v502, 0.0
        %v505 = vsel %vm289, %v503, 0.0
        %v506 = vld [vmem:[%s1 + $0xc] sm:$0xf]
        %508 = vset.pattern.permute.xlu0 0
        %509 = vperm.xlu0 %508, %v506
        %v510 = vpop.permute.xlu0 %509
        %v511 = vrot.slane %v510, 4
        %v513 = vmul.f32 %v504, %v511
        %v514 = vmul.f32 %v505, %v511
        %v515 = vld [vmem:[%s2 + $0xc] sm:$0xf]
        %517 = vset.pattern.permute.xlu0 0
        %518 = vperm.xlu0 %517, %v515
        %v519 = vpop.permute.xlu0 %518
        %v520 = vrot.slane %v519, 4
        %v522 = vadd.f32 %v513, %v520
        %v523 = vadd.f32 %v514, %v520
        %v524 = vxor.u32 %v522, 2147483648
        %v525 = vxor.u32 %v523, 2147483648
        %v526 = vmul.f32 %v524, 1.442695
        %v527 = vpow.pop %v526
        %v528 = vmul.f32 %v525, 1.442695
        %v529 = vpow.pop %v528
        %v530 = vadd.f32 %v527, 1.0
        %v531 = vadd.f32 %v529, 1.0
        %v532 = vrcp.pop %v530
        %v533 = vmul.f32 1.0, %v532
        %v534 = vrcp.pop %v531
        %v535 = vmul.f32 1.0, %v534
        %v538 = vrot.slane %v473, 4
        %v539 = vrot.slane %v474, 4
        %v542 = vmul.f32 %v533, %v538
        %v543 = vmul.f32 %v535, %v539
        %v546 = vrot.slane %v542, 4
        %v547 = vrot.slane %v543, 4
        %v550 = vsub.f32 %v473, %v546
        %v551 = vsub.f32 %v474, %v547
        %v552 = vpack.c.bf16 %v542, %v542
        %v553 = vpack.c.bf16 %v543, %v543
        %v556 = vunpack.c.l.b16 %v552
        %v557 = vunpack.c.l.b16 %v553
        %v558 = vpack.c.b16 %v557, %v556
        %560 = vst [vmem:[%s253 + $0x8] sm:$0xcc] %v558
        %v561 = vmul.f32 %v542, %v504
        %v562 = vmul.f32 %v543, %v505
        %v565 = vrot.slane %v561, 4
        %v566 = vrot.slane %v562, 4
        %v569 = vadd.f32 %v486, %v565
        %v570 = vadd.f32 %v487, %v566
        %v571 = vsel %vm288, %v542, 0.0
        %v572 = vsel %vm289, %v543, 0.0
        %v573 = vsel %vm424, %v571, 0.0
        %v574 = vsel %vm424, %v572, 0.0
        %v575 = vadd.f32 %v573, %v574
        %576 = vadd.xlane.f32.xlu0 %v575
        %v577 = vpop.xlane.xlu0 %576
        %v579 = vlaneseq
        %v580 = vshrl.u32 %v579, 7
        %v581 = vsub.s32 %v431, %v580
        %v582 = vrot.slane %v577, %v581
        %584 = vst.msk [vmem:[%s281 - $0x1] sm:$0x10] %vm437, %v582
        %v585 = vld [vmem:[%s231 + $0x20] sm:$0xf]
        %v586 = vld [vmem:[%s231 + $0x28] sm:$0xf]
        %v587 = vsel %vm288, %v585, 0.0
        %v588 = vsel %vm289, %v586, 0.0
        %v589 = vld [vmem:[%s1 + $0x10] sm:$0xf]
        %591 = vset.pattern.permute.xlu0 0
        %592 = vperm.xlu0 %591, %v589
        %v593 = vpop.permute.xlu0 %592
        %v595 = vmul.f32 %v587, %v593
        %v596 = vmul.f32 %v588, %v593
        %v597 = vld [vmem:[%s2 + $0x10] sm:$0xf]
        %599 = vset.pattern.permute.xlu0 0
        %600 = vperm.xlu0 %599, %v597
        %v601 = vpop.permute.xlu0 %600
        %v603 = vadd.f32 %v595, %v601
        %v604 = vadd.f32 %v596, %v601
        %v605 = vxor.u32 %v603, 2147483648
        %v606 = vxor.u32 %v604, 2147483648
        %v607 = vmul.f32 %v605, 1.442695
        %v608 = vpow.pop %v607
        %v609 = vmul.f32 %v606, 1.442695
        %v610 = vpow.pop %v609
        %v611 = vadd.f32 %v608, 1.0
        %v612 = vadd.f32 %v610, 1.0
        %v613 = vrcp.pop %v611
        %v614 = vmul.f32 1.0, %v613
        %v615 = vrcp.pop %v612
        %v616 = vmul.f32 1.0, %v615
        %v617 = vmul.f32 %v614, %v550
        %v618 = vmul.f32 %v616, %v551
        %v619 = vsub.f32 %v550, %v617
        %v620 = vsub.f32 %v551, %v618
        %v621 = vpack.c.bf16 %v617, %v617
        %v622 = vpack.c.bf16 %v618, %v618
        %v625 = vunpack.c.l.b16 %v621
        %v626 = vunpack.c.l.b16 %v622
        %v627 = vpack.c.b16 %v626, %v625
        %629 = vst [vmem:[%s253 + $0x10] sm:$0x33] %v627
        %v630 = vmul.f32 %v617, %v587
        %v631 = vmul.f32 %v618, %v588
        %v632 = vadd.f32 %v569, %v630
        %v633 = vadd.f32 %v570, %v631
        %v634 = vsel %vm288, %v617, 0.0
        %v635 = vsel %vm289, %v618, 0.0
        %v636 = vsel %vm339, %v634, 0.0
        %v637 = vsel %vm339, %v635, 0.0
        %v638 = vadd.f32 %v636, %v637
        %639 = vadd.xlane.f32.xlu0 %v638
        %v640 = vpop.xlane.xlu0 %639
        %v642 = vlaneseq
        %v643 = vshrl.u32 %v642, 7
        %v644 = vsub.s32 %v285, %v643
        %v645 = vrot.slane %v640, %v644
        %647 = vst.msk [vmem:[%s281 + $0x4] sm:$0x1] %vm351, %v645
        %v648 = vld [vmem:[%s231 + $0x20] sm:$0xf0]
        %v649 = vld [vmem:[%s231 + $0x28] sm:$0xf0]
        %v650 = vsel %vm288, %v648, 0.0
        %v651 = vsel %vm289, %v649, 0.0
        %v652 = vld [vmem:[%s1 + $0x14] sm:$0xf]
        %654 = vset.pattern.permute.xlu0 0
        %655 = vperm.xlu0 %654, %v652
        %v656 = vpop.permute.xlu0 %655
        %v657 = vrot.slane %v656, 4
        %v659 = vmul.f32 %v650, %v657
        %v660 = vmul.f32 %v651, %v657
        %v661 = vld [vmem:[%s2 + $0x14] sm:$0xf]
        %663 = vset.pattern.permute.xlu0 0
        %664 = vperm.xlu0 %663, %v661
        %v665 = vpop.permute.xlu0 %664
        %v666 = vrot.slane %v665, 4
        %v668 = vadd.f32 %v659, %v666
        %v669 = vadd.f32 %v660, %v666
        %v670 = vxor.u32 %v668, 2147483648
        %v671 = vxor.u32 %v669, 2147483648
        %v672 = vmul.f32 %v670, 1.442695
        %v673 = vpow.pop %v672
        %v674 = vmul.f32 %v671, 1.442695
        %v675 = vpow.pop %v674
        %v676 = vadd.f32 %v673, 1.0
        %v677 = vadd.f32 %v675, 1.0
        %v678 = vrcp.pop %v676
        %v679 = vmul.f32 1.0, %v678
        %v680 = vrcp.pop %v677
        %v681 = vmul.f32 1.0, %v680
        %v684 = vrot.slane %v619, 4
        %v685 = vrot.slane %v620, 4
        %v688 = vmul.f32 %v679, %v684
        %v689 = vmul.f32 %v681, %v685
        %v692 = vrot.slane %v688, 4
        %v693 = vrot.slane %v689, 4
        %v696 = vsub.f32 %v619, %v692
        %v697 = vsub.f32 %v620, %v693
        %v698 = vpack.c.bf16 %v688, %v688
        %v699 = vpack.c.bf16 %v689, %v689
        %v702 = vunpack.c.l.b16 %v698
        %v703 = vunpack.c.l.b16 %v699
        %v704 = vpack.c.b16 %v703, %v702
        %706 = vst [vmem:[%s253 + $0x10] sm:$0xcc] %v704
        %v707 = vmul.f32 %v688, %v650
        %v708 = vmul.f32 %v689, %v651
        %v711 = vrot.slane %v707, 4
        %v712 = vrot.slane %v708, 4
        %v715 = vadd.f32 %v632, %v711
        %v716 = vadd.f32 %v633, %v712
        %v717 = vsel %vm288, %v688, 0.0
        %v718 = vsel %vm289, %v689, 0.0
        %v719 = vsel %vm424, %v717, 0.0
        %v720 = vsel %vm424, %v718, 0.0
        %v721 = vadd.f32 %v719, %v720
        %722 = vadd.xlane.f32.xlu0 %v721
        %v723 = vpop.xlane.xlu0 %722
        %v725 = vlaneseq
        %v726 = vshrl.u32 %v725, 7
        %v727 = vsub.s32 %v431, %v726
        %v728 = vrot.slane %v723, %v727
        %730 = vst.msk [vmem:[%s281 + $0x1] sm:$0x10] %vm437, %v728
        %v731 = vld [vmem:[%s231 + $0x30] sm:$0xf]
        %v732 = vld [vmem:[%s231 + $0x38] sm:$0xf]
        %v733 = vsel %vm288, %v731, 0.0
        %v734 = vsel %vm289, %v732, 0.0
        %v735 = vld [vmem:[%s1 + $0x18] sm:$0xf]
        %737 = vset.pattern.permute.xlu0 0
        %738 = vperm.xlu0 %737, %v735
        %v739 = vpop.permute.xlu0 %738
        %v741 = vmul.f32 %v733, %v739
        %v742 = vmul.f32 %v734, %v739
        %v743 = vld [vmem:[%s2 + $0x18] sm:$0xf]
        %745 = vset.pattern.permute.xlu0 0
        %746 = vperm.xlu0 %745, %v743
        %v747 = vpop.permute.xlu0 %746
        %v749 = vadd.f32 %v741, %v747
        %v750 = vadd.f32 %v742, %v747
        %v751 = vxor.u32 %v749, 2147483648
        %v752 = vxor.u32 %v750, 2147483648
        %v753 = vmul.f32 %v751, 1.442695
        %v754 = vpow.pop %v753
        %v755 = vmul.f32 %v752, 1.442695
        %v756 = vpow.pop %v755
        %v757 = vadd.f32 %v754, 1.0
        %v758 = vadd.f32 %v756, 1.0
        %v759 = vrcp.pop %v757
        %v760 = vmul.f32 1.0, %v759
        %v761 = vrcp.pop %v758
        %v762 = vmul.f32 1.0, %v761
        %v763 = vmul.f32 %v760, %v696
        %v764 = vmul.f32 %v762, %v697
        %v765 = vsub.f32 %v696, %v763
        %v766 = vsub.f32 %v697, %v764
        %v767 = vpack.c.bf16 %v763, %v763
        %v768 = vpack.c.bf16 %v764, %v764
        %v771 = vunpack.c.l.b16 %v767
        %v772 = vunpack.c.l.b16 %v768
        %v773 = vpack.c.b16 %v772, %v771
        %775 = vst [vmem:[%s253 + $0x18] sm:$0x33] %v773
        %v776 = vmul.f32 %v763, %v733
        %v777 = vmul.f32 %v764, %v734
        %v778 = vadd.f32 %v715, %v776
        %v779 = vadd.f32 %v716, %v777
        %v780 = vsel %vm288, %v763, 0.0
        %v781 = vsel %vm289, %v764, 0.0
        %v782 = vsel %vm339, %v780, 0.0
        %v783 = vsel %vm339, %v781, 0.0
        %v784 = vadd.f32 %v782, %v783
        %785 = vadd.xlane.f32.xlu0 %v784
        %v786 = vpop.xlane.xlu0 %785
        %v788 = vlaneseq
        %v789 = vshrl.u32 %v788, 7
        %v790 = vsub.s32 %v285, %v789
        %v791 = vrot.slane %v786, %v790
        %793 = vst.msk [vmem:[%s281 + $0x6] sm:$0x1] %vm351, %v791
        %v794 = vld [vmem:[%s231 + $0x30] sm:$0xf0]
        %v795 = vld [vmem:[%s231 + $0x38] sm:$0xf0]
        %v796 = vsel %vm288, %v794, 0.0
        %v797 = vsel %vm289, %v795, 0.0
        %v798 = vld [vmem:[%s1 + $0x1c] sm:$0xf]
        %800 = vset.pattern.permute.xlu0 0
        %801 = vperm.xlu0 %800, %v798
        %v802 = vpop.permute.xlu0 %801
        %v803 = vrot.slane %v802, 4
        %v805 = vmul.f32 %v796, %v803
        %v806 = vmul.f32 %v797, %v803
        %v807 = vld [vmem:[%s2 + $0x1c] sm:$0xf]
        %809 = vset.pattern.permute.xlu0 0
        %810 = vperm.xlu0 %809, %v807
        %v811 = vpop.permute.xlu0 %810
        %v812 = vrot.slane %v811, 4
        %v814 = vadd.f32 %v805, %v812
        %v815 = vadd.f32 %v806, %v812
        %v816 = vxor.u32 %v814, 2147483648
        %v817 = vxor.u32 %v815, 2147483648
        %v818 = vmul.f32 %v816, 1.442695
        %v819 = vpow.pop %v818
        %v820 = vmul.f32 %v817, 1.442695
        %v821 = vpow.pop %v820
        %v822 = vadd.f32 %v819, 1.0
        %v823 = vadd.f32 %v821, 1.0
        %v824 = vrcp.pop %v822
        %v825 = vmul.f32 1.0, %v824
        %v826 = vrcp.pop %v823
        %v827 = vmul.f32 1.0, %v826
        %v830 = vrot.slane %v765, 4
        %v831 = vrot.slane %v766, 4
        %v834 = vmul.f32 %v825, %v830
        %v835 = vmul.f32 %v827, %v831
        %v838 = vrot.slane %v834, 4
        %v839 = vrot.slane %v835, 4
        %v842 = vsub.f32 %v765, %v838
        %v843 = vsub.f32 %v766, %v839
        %v844 = vpack.c.bf16 %v834, %v834
        %v845 = vpack.c.bf16 %v835, %v835
        %v848 = vunpack.c.l.b16 %v844
        %v849 = vunpack.c.l.b16 %v845
        %v850 = vpack.c.b16 %v849, %v848
        %852 = vst [vmem:[%s253 + $0x18] sm:$0xcc] %v850
        %v853 = vmul.f32 %v834, %v796
        %v854 = vmul.f32 %v835, %v797
        %v857 = vrot.slane %v853, 4
        %v858 = vrot.slane %v854, 4
        %v861 = vadd.f32 %v778, %v857
        %v862 = vadd.f32 %v779, %v858
        %v863 = vsel %vm288, %v834, 0.0
        %v864 = vsel %vm289, %v835, 0.0
        %v865 = vsel %vm424, %v863, 0.0
        %v866 = vsel %vm424, %v864, 0.0
        %v867 = vadd.f32 %v865, %v866
        %868 = vadd.xlane.f32.xlu0 %v867
        %v869 = vpop.xlane.xlu0 %868
        %v871 = vlaneseq
        %v872 = vshrl.u32 %v871, 7
        %v873 = vsub.s32 %v431, %v872
        %v874 = vrot.slane %v869, %v873
        %876 = vst.msk [vmem:[%s281 + $0x3] sm:$0x10] %vm437, %v874
        %v877 = vld [vmem:[%s231 + $0x40] sm:$0xf]
        %v878 = vld [vmem:[%s231 + $0x48] sm:$0xf]
        %v879 = vsel %vm288, %v877, 0.0
        %v880 = vsel %vm289, %v878, 0.0
        %v881 = vpack.c.bf16 %v842, %v842
        %v882 = vpack.c.bf16 %v843, %v843
        %v885 = vunpack.c.l.b16 %v881
        %v886 = vunpack.c.l.b16 %v882
        %v887 = vpack.c.b16 %v886, %v885
        %889 = vst [vmem:[%s253 + $0x20] sm:$0x33] %v887
        %v890 = vmul.f32 %v842, %v879
        %v891 = vmul.f32 %v843, %v880
        %v892 = vadd.f32 %v861, %v890
        %v893 = vadd.f32 %v862, %v891
        %v894 = vsel %vm288, %v842, 0.0
        %v895 = vsel %vm289, %v843, 0.0
        %v896 = vsel %vm339, %v894, 0.0
        %v897 = vsel %vm339, %v895, 0.0
        %v898 = vadd.f32 %v896, %v897
        %899 = vadd.xlane.f32.xlu0 %v898
        %v900 = vpop.xlane.xlu0 %899
        %v902 = vlaneseq
        %v903 = vshrl.u32 %v902, 7
        %v904 = vsub.s32 %v285, %v903
        %v905 = vrot.slane %v900, %v904
        %907 = vst.msk [vmem:[%s281 + $0x8] sm:$0x1] %vm351, %v905
        %v908 = vsel %vm339, %v892, 0.0
        %v909 = vsel %vm339, %v893, 0.0
        %v910 = vadd.f32 %v908, %v909
        %911 = vadd.xlane.f32.xlu0 %v910
        %v912 = vpop.xlane.xlu0 %911
        %v914 = vlaneseq
        %v915 = vshrl.u32 %v914, 7
        %v916 = vsub.s32 %v285, %v915
        %v917 = vrot.slane %v912, %v916
        %919 = vst.msk [vmem:[%s259] sm:$0x1] %vm351, %v917
        %s920 = sand.u32 %s102, 1
        %s921 = scalar_lea.sflag [#allocation4], %s920
        %s922 = sand.u32 %s102, 1
        %s923 = smul.addr %s922, 40
        %s924 = scalar_lea.vmem [#allocation5], %s923
        %s925 = sand.u32 %s128, 1
        %s926 = scalar_lea.sflag [#allocation7], %s925
        %s927 = sand.u32 %s128, 1
        %s928 = scalar_lea.vmem [#allocation6], %s927
        %p929 = scmp.lt.s32.totalorder %s26, 1
        %s930 = scalar_select %p929, %s26, 1
        %s931 = smul.addr %s930, 2
        %s932 = smul.addr %s931, 8
        %s933 = scalar_lea.vmem %s5, %s932
        // Predicated region
        $region37: #{tpu_custom_call.1} parent=31 // pred_check
          %p934 = pneg %p112
        $region38: #{tpu_custom_call.1} parent=31 // pred_check_branch
          %936 = sbr.rel (%p934) target = $region40
        $region39: #{tpu_custom_call.1} parent=31 // pred_region
          %s937 = smul.u32 2, %s26
          %s938 = ssub.s32 3, %s937
          %p939 = scmp.lt.s32.totalorder %s938, 2
          %s940 = scalar_select %p939, %s938, 2
          %s941 = smul.u32 320, %s940
          %s943 = ssub.s32 640, %s941
          %944 = vsyncadd %s921, %s943
          %p945 = scmp.ne.s32.totalorder 0, %s941
          %s946 = smul.addr %s937, 64
          %s947 = scalar_lea.hbm %s3, %s946
          %s948 = smul.u32 %s940, 4
          %s949 = smul.u32 %s948, 5
          %s950 = sshll.u32 %s924, 4
          %s951 = int_to_ptr.vmem [resolvable:$true] %s950
          %s952 = sshll.u32 %s949, 4
          %956 = dma.vmem_to_hbm [thread:$0]  (%p945), %s951, %s952, %s947, %s921, 128, 192, %s948
        $region40: #{tpu_custom_call.1} parent=31 // pred_fallthru
          _
        // Predicated region
        $region41: #{tpu_custom_call.1} parent=31 // pred_check
          %p957 = pneg %p138
        $region42: #{tpu_custom_call.1} parent=31 // pred_check_branch
          %959 = sbr.rel (%p957) target = $region44
        $region43: #{tpu_custom_call.1} parent=31 // pred_region
          %s961 = ssub.s32 16, 16
          %962 = vsyncadd %s926, %s961
          %s963 = smul.addr %s26, 16
          %s964 = scalar_lea.hbm %s4, %s963
          %s966 = sshll.u32 %s928, 4
          %s967 = int_to_ptr.vmem [resolvable:$true] %s966
          %969 = dma.vmem_to_hbm [thread:$0]  %s967, 16, %s964, %s926
        $region44: #{tpu_custom_call.1} parent=31 // pred_fallthru
          _
        // Predicated region
        $region45: #{tpu_custom_call.1} parent=31 // pred_check
          %p970 = pneg %p164
        $region46: #{tpu_custom_call.1} parent=31 // pred_check_branch
          %972 = sbr.rel (%p970) target = $region48
        $region47: #{tpu_custom_call.1} parent=31 // pred_region
          _
        $region48: #{tpu_custom_call.1} parent=31 // pred_fallthru
          _
      $region32: #{tpu_custom_call.1} parent=5 // pred_fallthru
        _
      %p973 = scmp.le.s32.totalorder 2, %s21
      // Predicated region
      $region49: #{tpu_custom_call.1} parent=5 // pred_check
        %p974 = pneg %p973
      $region50: #{tpu_custom_call.1} parent=5 // pred_check_branch
        %976 = sbr.rel (%p974) target = $region52
      $region51: #{tpu_custom_call.1} parent=5 // pred_region
        %s977 = ssub.s32 %s21, 2
        // Predicated region
        $region53: #{tpu_custom_call.1} parent=51 // pred_check
          %p978 = pneg %p118
        $region54: #{tpu_custom_call.1} parent=51 // pred_check_branch
          %980 = sbr.rel (%p978) target = $region56
        $region55: #{tpu_custom_call.1} parent=51 // pred_region
          %s981 = sand.u32 %s103, 1
          %s982 = scalar_lea.sflag [#allocation4], %s981
          %s983 = sand.u32 %s103, 1
          %s984 = smul.addr %s983, 40
          %s985 = scalar_lea.vmem [#allocation5], %s984
          %986 = dma.done %s982, 640
        $region56: #{tpu_custom_call.1} parent=51 // pred_fallthru
          _
        // Predicated region
        $region57: #{tpu_custom_call.1} parent=51 // pred_check
          %p987 = pneg %p144
        $region58: #{tpu_custom_call.1} parent=51 // pred_check_branch
          %989 = sbr.rel (%p987) target = $region60
        $region59: #{tpu_custom_call.1} parent=51 // pred_region
          %s990 = sand.u32 %s129, 1
          %s991 = scalar_lea.sflag [#allocation7], %s990
          %s992 = sand.u32 %s129, 1
          %s993 = scalar_lea.vmem [#allocation6], %s992
          %994 = dma.done %s991, 16
        $region60: #{tpu_custom_call.1} parent=51 // pred_fallthru
          _
        // Predicated region
        $region61: #{tpu_custom_call.1} parent=51 // pred_check
          %p995 = pneg %p170
        $region62: #{tpu_custom_call.1} parent=51 // pred_check_branch
          %997 = sbr.rel (%p995) target = $region64
        $region63: #{tpu_custom_call.1} parent=51 // pred_region
          %p998 = scmp.lt.s32.totalorder %s27, 1
          %s999 = scalar_select %p998, %s27, 1
          %s1000 = smul.addr %s999, 2
          %s1001 = smul.addr %s1000, 8
          %s1002 = scalar_lea.vmem %s5, %s1001
        $region64: #{tpu_custom_call.1} parent=51 // pred_fallthru
          _
      $region52: #{tpu_custom_call.1} parent=5 // pred_fallthru
        _
    $region6: #{tpu_custom_call.1} parent=1 // loop_footer
      %s25 = sadd.s32 1, %s21
    $region7: #{tpu_custom_call.1} parent=1 // loop_footer_branch
      %20 = sbr.rel target = $region3
    $region8: #{tpu_custom_call.1} parent=1 // loop_exit
      _
    %1003 = vsyncpa [#allocation3], 1
    %s1004 = scalar_lea.sflag [#allocation3], 1
    %1005 = vsyncpa %s1004, 1
    %1006 = vsyncpa [#allocation4], 1
    %s1007 = scalar_lea.sflag [#allocation4], 1
    %1008 = vsyncpa %s1007, 1
    %1009 = vsyncpa [#allocation7], 1
    %s1010 = scalar_lea.sflag [#allocation7], 1
    %1011 = vsyncpa %s1010, 1

</llo_original>
